<compile_context>
chip_gen: v7x
topology: tpu7x:2x2x1
jax: 0.10.0
libtpu: 0.0.40
codegen_flags: <defaults>
</compile_context>

<pallas_src>
import numpy as np
import jax
import jax.numpy as jnp
from jax.experimental import pallas as pl
from jax.experimental.pallas import tpu as pltpu

BN_EPS = 1e-5
HW_CHUNK = 8   # HW rows folded into local partials before touching the big accumulators


def _vmem_capacity_bytes():
    """Physical per-TensorCore VMEM, with a conservative v7x fallback."""
    try:
        return int(pltpu.get_tpu_info().vmem_capacity_bytes)
    except Exception:
        return 64 << 20


def _pick_batch_tile(B, HW, C, feat_itemsize, vmem_cap, param_bytes):
    """Largest batch tile that fits the VMEM budget and keeps >=4 grid steps."""
    row_bytes = 2 * HW * C * feat_itemsize            # double-buffered feature DMA / row
    reserve = 2 * param_bytes + (6 << 20)             # params (2 bufs) + accumulators + slack
    budget = max(vmem_cap - reserve, 4 << 20)
    cap = max(8, min(256, (int(budget // max(row_bytes, 1)) // 8) * 8))
    cands = [t for t in range(8, min(B, cap) + 1, 8) if B % t == 0]
    if not cands:
        return B                                      # tiny batch: one full block
    for min_steps in (4, 2, 1):                       # prefer >=2 steps per TC on v7x
        ok = [t for t in cands if B // t >= min_steps]
        if ok:
            return max(ok)
    return max(cands)


def fold_params(p, C, weight_dtype=jnp.bfloat16):
    """Fold the eval-mode BatchNorms into the fc weights (exact in eval mode).

    Weights are returned in bf16 (inference precision; halves weight DMA/VMEM),
    biases stay f32. Only valid with eval-mode BN (running stats) and dropout=identity.
    """
    a0 = p["g0"] * jax.lax.rsqrt(p["rv0"] + BN_EPS)          # (2C,)
    c0 = p["be0"] - p["rm0"] * a0
    w1f = p["w1"] * a0[:, None]                              # (2C, h1)
    b1f = c0 @ p["w1"] + p["b1"]                             # (h1,)

    a1 = p["g1"] * jax.lax.rsqrt(p["rv1"] + BN_EPS)          # (h1,)
    c1 = p["be1"] - p["rm1"] * a1
    w2f = p["w2"] * a1[:, None]                              # (h1, out)
    b2f = c1 @ p["w2"] + p["b2"]                             # (out,)

    # avg half is w1[:C], max half is w1[C:] (matches torch.cat((ap, mp), dim=1)).
    return (w1f[:C].astype(weight_dtype), w1f[C:].astype(weight_dtype),
            b1f.reshape(1, -1).astype(jnp.float32),
            w2f.astype(weight_dtype), b2f.reshape(1, -1).astype(jnp.float32))


def prepare_features(feat_nchw, feat_dtype=jnp.bfloat16):
    """(B, C, H, W) f32 -> flattened channels-last (B, HW*C) bf16.

    TODO(synk): fuse this into the backbone (have resnet50 emit NHWC bf16
    directly); as a standalone prepass it is an extra HBM read+write.
    """
    B, C, H, W = feat_nchw.shape
    x = jnp.transpose(feat_nchw, (0, 2, 3, 1)).reshape(B, H * W * C)
    return x.astype(feat_dtype), H * W, C


def myresnet_head(feat_nchw, params, *, batch_tile=None, feat_dtype=jnp.bfloat16):
    """Fused pool + (BN-folded) MLP head on a (B, C, H, W) backbone feature map."""
    B = feat_nchw.shape[0]
    x, HW, C = prepare_features(feat_nchw, feat_dtype)
    h1 = params["w1"].shape[1]
    out_dim = params["w2"].shape[1]

    w1a, w1b, b1f, w2f, b2f = fold_params(params, C)
    param_bytes = sum(int(a.size) * a.dtype.itemsize for a in (w1a, w1b, b1f, w2f, b2f))
    itemsize = jnp.dtype(feat_dtype).itemsize
    vmem_cap = _vmem_capacity_bytes()

    if batch_tile is None:
        batch_tile = _pick_batch_tile(B, HW, C, itemsize, vmem_cap, param_bytes)
    assert B % batch_tile == 0, (B, batch_tile)
    grid = (B // batch_tile,)

    # VMEM budget derived together with the tile: double-buffered bf16 feature
    # block + (double-buffered) params + pooling accumulators + margin.
    feat_block = batch_tile * HW * C * itemsize
    acc_bytes = batch_tile * C * (4 + itemsize) + batch_tile * h1 * 4
    vmem_limit = 2 * feat_block + 2 * param_bytes + acc_bytes + (4 << 20)
    vmem_limit = int(max(16 << 20, min(vmem_limit, vmem_cap - (8 << 20))))

    def kernel(x_ref, w1a_ref, w1b_ref, b1_ref, w2_ref, b2_ref, o_ref):
        tb = x_ref.shape[0]
        # ---- pooling: chunked accumulation, no full-tile f32 temp ---------------
        # The mean accumulates in f32; the max is exact in bf16 (compares only).
        acc_sum = jnp.zeros((tb, C), jnp.float32)
        acc_max = jnp.full((tb, C), -jnp.inf, dtype=x_ref.dtype)
        for h0 in range(0, HW, HW_CHUNK):
            hend = min(h0 + HW_CHUNK, HW)
            v = x_ref[:, h0 * C:(h0 + 1) * C]            # (tb, C) lane-aligned slice
            part_sum = v.astype(jnp.float32)
            part_max = v
            for h in range(h0 + 1, hend):
                v = x_ref[:, h * C:(h + 1) * C]
                part_sum = part_sum + v.astype(jnp.float32)
                part_max = jnp.maximum(part_max, v)
            acc_sum = acc_sum + part_sum
            acc_max = jnp.maximum(acc_max, part_max)
        ap = (acc_sum * (1.0 / HW)).astype(x_ref.dtype)  # AdaptiveAvgPool2d -> bf16
        mp = acc_max                                     # AdaptiveMaxPool2d  (bf16)

        # ---- fc1 on cat([avg, max]): BN0 folded, concat removed by splitting w1
        # into its avg/max halves. bf16 x bf16 -> f32 on the MXU.
        z = jnp.dot(ap, w1a_ref[...], preferred_element_type=jnp.float32)
        z = z + jnp.dot(mp, w1b_ref[...], preferred_element_type=jnp.float32)
        z = jnp.maximum(z + b1_ref[...], 0.0)            # ReLU; dropout = identity (eval)

        # ---- fc2 (BN1 folded) + sigmoid ----
        y = jnp.dot(z.astype(w2_ref.dtype), w2_ref[...],
                    preferred_element_type=jnp.float32) + b2_ref[...]
        o_ref[...] = jax.nn.sigmoid(y).astype(o_ref.dtype)

    def const_spec(shape):
        # Grid-invariant parameter block (same block every step; no re-DMA).
        # TODO(synk): on v7x, pipeline_mode=pl.Buffered(1) would drop the second
        # param buffer (~param_bytes of VMEM headroom); verify with lower_as_mlir.
        return pl.BlockSpec(shape, lambda i: (0,) * len(shape))

    return pl.pallas_call(
        kernel,
        out_shape=jax.ShapeDtypeStruct((B, out_dim), jnp.float32),
        grid_spec=pltpu.PrefetchScalarGridSpec(
            num_scalar_prefetch=0,
            grid=grid,
            in_specs=[
                pl.BlockSpec((batch_tile, HW * C), lambda i: (i, 0)),  # features (bf16)
                const_spec((C, h1)),          # fc1 weight, avg half (BN0 folded, bf16)
                const_spec((C, h1)),          # fc1 weight, max half (BN0 folded, bf16)
                const_spec((1, h1)),          # fc1 bias (BN0 folded, f32)
                const_spec((h1, out_dim)),    # fc2 weight (BN1 folded, bf16)
                const_spec((1, out_dim)),     # fc2 bias (BN1 folded, f32)
            ],
            out_specs=pl.BlockSpec((batch_tile, out_dim), lambda i: (i, 0)),
        ),
        compiler_params=pltpu.CompilerParams(
            dimension_semantics=("parallel",),
            vmem_limit_bytes=vmem_limit,
        ),
    )(x, w1a, w1b, b1f, w2f, b2f)


def init_params(key, C, h1, out_dim):
    """Params in MyResnet.__init__ layout, with non-trivial BN running stats."""
    ks = jax.random.split(key, 10)
    # nn.init.kaiming_normal_(fc.weight): std = sqrt(2 / fan_in), bias = 0.
    w1_pt = jax.random.normal(ks[0], (h1, 2 * C), jnp.float32) * jnp.sqrt(2.0 / (2 * C))
    w2_pt = jax.random.normal(ks[1], (out_dim, h1), jnp.float32) * jnp.sqrt(2.0 / h1)
    return dict(
        g0=1.0 + 0.1 * jax.random.normal(ks[2], (2 * C,), jnp.float32),
        be0=0.1 * jax.random.normal(ks[3], (2 * C,), jnp.float32),
        rm0=0.1 * jax.random.normal(ks[4], (2 * C,), jnp.float32),
        rv0=0.5 + jax.random.uniform(ks[5], (2 * C,), jnp.float32),
        w1=w1_pt.T,                                  # stored as (in, out)
        b1=jnp.zeros((h1,), jnp.float32),
        g1=1.0 + 0.1 * jax.random.normal(ks[6], (h1,), jnp.float32),
        be1=0.1 * jax.random.normal(ks[7], (h1,), jnp.float32),
        rm1=0.1 * jax.random.normal(ks[8], (h1,), jnp.float32),
        rv1=0.5 + jax.random.uniform(ks[9], (h1,), jnp.float32),
        w2=w2_pt.T,
        b2=jnp.zeros((out_dim,), jnp.float32),
    )


def reference(feat_nchw, p, feat_dtype=jnp.bfloat16):
    """Pure-JAX reference of the same head (eval mode), unfused / unfolded f32 math.

    Consumes the same bf16-cast features as the kernel (deliberate inference
    precision); weights stay f32 here, so the comparison tolerance is bf16-level.
    """
    B, C, H, W = feat_nchw.shape
    x = feat_nchw.astype(feat_dtype).astype(jnp.float32).reshape(B, C, H * W)
    f = jnp.concatenate([jnp.mean(x, -1), jnp.max(x, -1)], axis=1)
    f = (f - p["rm0"]) * jax.lax.rsqrt(p["rv0"] + BN_EPS) * p["g0"] + p["be0"]
    z = jnp.maximum(f @ p["w1"] + p["b1"], 0.0)
    z = (z - p["rm1"]) * jax.lax.rsqrt(p["rv1"] + BN_EPS) * p["g1"] + p["be1"]
    return jax.nn.sigmoid(z @ p["w2"] + p["b2"])


if __name__ == "__main__":
    key = jax.random.PRNGKey(0)
    # Scaled-down MyResnet(inp=C, h1=128, out=5); the feature map stands in for
    # resnet50(children[:-2])(image). Real dims would be C=2048, HW=7*7, h1=1024.
    B, C, H, W = 32, 128, 4, 4
    H1, OUT = 128, 5

    k_feat, k_param = jax.random.split(key)
    feat = jax.random.normal(k_feat, (B, C, H, W), jnp.float32)
    params = init_params(k_param, C, H1, OUT)

    out = jax.block_until_ready(myresnet_head(feat, params))
    ref = reference(feat, params)

    assert out.shape == (B, OUT)
    # Deliberate inference precision: features and folded fc weights are bf16 in
    # the kernel (the reference uses the same bf16 features but f32 unfolded
    # math), so the tolerance is bf16-level rather than exact.
    np.testing.assert_allclose(np.asarray(out), np.asarray(ref), atol=3e-2, rtol=3e-2)
    print("KERNEL_OK")
</pallas_src>

<mosaic_0001>
module attributes {stable_mosaic.version = 11 : i64} {
  func.func @kernel(%arg0: i32, %arg1: memref<8x2048xbf16, #tpu.memory_space<vmem>>, %arg2: memref<128x128xbf16, #tpu.memory_space<vmem>>, %arg3: memref<128x128xbf16, #tpu.memory_space<vmem>>, %arg4: memref<1x128xf32, #tpu.memory_space<vmem>>, %arg5: memref<128x5xbf16, #tpu.memory_space<vmem>>, %arg6: memref<1x5xf32, #tpu.memory_space<vmem>>, %arg7: memref<8x5xf32, #tpu.memory_space<vmem>>) attributes {dimension_semantics = [#tpu.dimension_semantics<parallel>], iteration_bounds = array<i64: 4>, scalar_prefetch = 0 : i64, scratch_operands = 0 : i64, tpu.core_type = #tpu.core_type<tc>, window_params = [{transform_indices = @transform_0, window_bounds = array<i64: 8, 2048>}, {pipeline_mode = #tpu.pipeline_mode<synchronous>, transform_indices = @transform_1, window_bounds = array<i64: 128, 128>}, {pipeline_mode = #tpu.pipeline_mode<synchronous>, transform_indices = @transform_2, window_bounds = array<i64: 128, 128>}, {pipeline_mode = #tpu.pipeline_mode<synchronous>, transform_indices = @transform_3, window_bounds = array<i64: 1, 128>}, {pipeline_mode = #tpu.pipeline_mode<synchronous>, transform_indices = @transform_4, window_bounds = array<i64: 128, 5>}, {pipeline_mode = #tpu.pipeline_mode<synchronous>, transform_indices = @transform_5, window_bounds = array<i64: 1, 5>}, {transform_indices = @transform_6, window_bounds = array<i64: 8, 5>}]} {
    %cst = arith.constant 0.000000e+00 : f32
    %0 = vector.broadcast %cst : f32 to vector<8x128xf32>
    %cst_0 = arith.constant 0xFF80 : bf16
    %1 = vector.broadcast %cst_0 : bf16 to vector<8x128xbf16>
    %c0 = arith.constant 0 : index
    %c0_1 = arith.constant 0 : index
    %2 = vector.load %arg1[%c0, %c0_1] : memref<8x2048xbf16, #tpu.memory_space<vmem>>, vector<8x128xbf16>
    %3 = arith.extf %2 : vector<8x128xbf16> to vector<8x128xf32>
    %c0_2 = arith.constant 0 : index
    %c128 = arith.constant 128 : index
    %4 = vector.load %arg1[%c0_2, %c128] : memref<8x2048xbf16, #tpu.memory_space<vmem>>, vector<8x128xbf16>
    %5 = arith.extf %4 : vector<8x128xbf16> to vector<8x128xf32>
    %6 = arith.addf %3, %5 : vector<8x128xf32>
    %7 = arith.maximumf %2, %4 : vector<8x128xbf16>
    %c0_3 = arith.constant 0 : index
    %c256 = arith.constant 256 : index
    %8 = vector.load %arg1[%c0_3, %c256] : memref<8x2048xbf16, #tpu.memory_space<vmem>>, vector<8x128xbf16>
    %9 = arith.extf %8 : vector<8x128xbf16> to vector<8x128xf32>
    %10 = arith.addf %6, %9 : vector<8x128xf32>
    %11 = arith.maximumf %7, %8 : vector<8x128xbf16>
    %c0_4 = arith.constant 0 : index
    %c384 = arith.constant 384 : index
    %12 = vector.load %arg1[%c0_4, %c384] : memref<8x2048xbf16, #tpu.memory_space<vmem>>, vector<8x128xbf16>
    %13 = arith.extf %12 : vector<8x128xbf16> to vector<8x128xf32>
    %14 = arith.addf %10, %13 : vector<8x128xf32>
    %15 = arith.maximumf %11, %12 : vector<8x128xbf16>
    %c0_5 = arith.constant 0 : index
    %c512 = arith.constant 512 : index
    %16 = vector.load %arg1[%c0_5, %c512] : memref<8x2048xbf16, #tpu.memory_space<vmem>>, vector<8x128xbf16>
    %17 = arith.extf %16 : vector<8x128xbf16> to vector<8x128xf32>
    %18 = arith.addf %14, %17 : vector<8x128xf32>
    %19 = arith.maximumf %15, %16 : vector<8x128xbf16>
    %c0_6 = arith.constant 0 : index
    %c640 = arith.constant 640 : index
    %20 = vector.load %arg1[%c0_6, %c640] : memref<8x2048xbf16, #tpu.memory_space<vmem>>, vector<8x128xbf16>
    %21 = arith.extf %20 : vector<8x128xbf16> to vector<8x128xf32>
    %22 = arith.addf %18, %21 : vector<8x128xf32>
    %23 = arith.maximumf %19, %20 : vector<8x128xbf16>
    %c0_7 = arith.constant 0 : index
    %c768 = arith.constant 768 : index
    %24 = vector.load %arg1[%c0_7, %c768] : memref<8x2048xbf16, #tpu.memory_space<vmem>>, vector<8x128xbf16>
    %25 = arith.extf %24 : vector<8x128xbf16> to vector<8x128xf32>
    %26 = arith.addf %22, %25 : vector<8x128xf32>
    %27 = arith.maximumf %23, %24 : vector<8x128xbf16>
    %c0_8 = arith.constant 0 : index
    %c896 = arith.constant 896 : index
    %28 = vector.load %arg1[%c0_8, %c896] : memref<8x2048xbf16, #tpu.memory_space<vmem>>, vector<8x128xbf16>
    %29 = arith.extf %28 : vector<8x128xbf16> to vector<8x128xf32>
    %30 = arith.addf %26, %29 : vector<8x128xf32>
    %31 = arith.maximumf %27, %28 : vector<8x128xbf16>
    %32 = arith.addf %0, %30 : vector<8x128xf32>
    %33 = arith.maximumf %1, %31 : vector<8x128xbf16>
    %c0_9 = arith.constant 0 : index
    %c1024 = arith.constant 1024 : index
    %34 = vector.load %arg1[%c0_9, %c1024] : memref<8x2048xbf16, #tpu.memory_space<vmem>>, vector<8x128xbf16>
    %35 = arith.extf %34 : vector<8x128xbf16> to vector<8x128xf32>
    %c0_10 = arith.constant 0 : index
    %c1152 = arith.constant 1152 : index
    %36 = vector.load %arg1[%c0_10, %c1152] : memref<8x2048xbf16, #tpu.memory_space<vmem>>, vector<8x128xbf16>
    %37 = arith.extf %36 : vector<8x128xbf16> to vector<8x128xf32>
    %38 = arith.addf %35, %37 : vector<8x128xf32>
    %39 = arith.maximumf %34, %36 : vector<8x128xbf16>
    %c0_11 = arith.constant 0 : index
    %c1280 = arith.constant 1280 : index
    %40 = vector.load %arg1[%c0_11, %c1280] : memref<8x2048xbf16, #tpu.memory_space<vmem>>, vector<8x128xbf16>
    %41 = arith.extf %40 : vector<8x128xbf16> to vector<8x128xf32>
    %42 = arith.addf %38, %41 : vector<8x128xf32>
    %43 = arith.maximumf %39, %40 : vector<8x128xbf16>
    %c0_12 = arith.constant 0 : index
    %c1408 = arith.constant 1408 : index
    %44 = vector.load %arg1[%c0_12, %c1408] : memref<8x2048xbf16, #tpu.memory_space<vmem>>, vector<8x128xbf16>
    %45 = arith.extf %44 : vector<8x128xbf16> to vector<8x128xf32>
    %46 = arith.addf %42, %45 : vector<8x128xf32>
    %47 = arith.maximumf %43, %44 : vector<8x128xbf16>
    %c0_13 = arith.constant 0 : index
    %c1536 = arith.constant 1536 : index
    %48 = vector.load %arg1[%c0_13, %c1536] : memref<8x2048xbf16, #tpu.memory_space<vmem>>, vector<8x128xbf16>
    %49 = arith.extf %48 : vector<8x128xbf16> to vector<8x128xf32>
    %50 = arith.addf %46, %49 : vector<8x128xf32>
    %51 = arith.maximumf %47, %48 : vector<8x128xbf16>
    %c0_14 = arith.constant 0 : index
    %c1664 = arith.constant 1664 : index
    %52 = vector.load %arg1[%c0_14, %c1664] : memref<8x2048xbf16, #tpu.memory_space<vmem>>, vector<8x128xbf16>
    %53 = arith.extf %52 : vector<8x128xbf16> to vector<8x128xf32>
    %54 = arith.addf %50, %53 : vector<8x128xf32>
    %55 = arith.maximumf %51, %52 : vector<8x128xbf16>
    %c0_15 = arith.constant 0 : index
    %c1792 = arith.constant 1792 : index
    %56 = vector.load %arg1[%c0_15, %c1792] : memref<8x2048xbf16, #tpu.memory_space<vmem>>, vector<8x128xbf16>
    %57 = arith.extf %56 : vector<8x128xbf16> to vector<8x128xf32>
    %58 = arith.addf %54, %57 : vector<8x128xf32>
    %59 = arith.maximumf %55, %56 : vector<8x128xbf16>
    %c0_16 = arith.constant 0 : index
    %c1920 = arith.constant 1920 : index
    %60 = vector.load %arg1[%c0_16, %c1920] : memref<8x2048xbf16, #tpu.memory_space<vmem>>, vector<8x128xbf16>
    %61 = arith.extf %60 : vector<8x128xbf16> to vector<8x128xf32>
    %62 = arith.addf %58, %61 : vector<8x128xf32>
    %63 = arith.maximumf %59, %60 : vector<8x128xbf16>
    %64 = arith.addf %32, %62 : vector<8x128xf32>
    %65 = arith.maximumf %33, %63 : vector<8x128xbf16>
    %cst_17 = arith.constant 6.250000e-02 : f32
    %66 = vector.broadcast %cst_17 : f32 to vector<8x128xf32>
    %67 = arith.mulf %64, %66 : vector<8x128xf32>
    %68 = arith.truncf %67 : vector<8x128xf32> to vector<8x128xbf16>
    %c0_18 = arith.constant 0 : index
    %c0_19 = arith.constant 0 : index
    %69 = vector.load %arg2[%c0_18, %c0_19] : memref<128x128xbf16, #tpu.memory_space<vmem>>, vector<128x128xbf16>
    %cst_20 = arith.constant dense<0.000000e+00> : vector<8x128xf32>
    %70 = tpu.matmul %68, %69, %cst_20 {dimension_numbers = #tpu.dot_dimension_numbers<[1], [0], [0], [1], [0, 0, 1, 1], [], []>} : vector<8x128xbf16>, vector<128x128xbf16>, vector<8x128xf32> -> vector<8x128xf32>
    %c0_21 = arith.constant 0 : index
    %c0_22 = arith.constant 0 : index
    %71 = vector.load %arg3[%c0_21, %c0_22] : memref<128x128xbf16, #tpu.memory_space<vmem>>, vector<128x128xbf16>
    %cst_23 = arith.constant dense<0.000000e+00> : vector<8x128xf32>
    %72 = tpu.matmul %65, %71, %cst_23 {dimension_numbers = #tpu.dot_dimension_numbers<[1], [0], [0], [1], [0, 0, 1, 1], [], []>} : vector<8x128xbf16>, vector<128x128xbf16>, vector<8x128xf32> -> vector<8x128xf32>
    %73 = arith.addf %70, %72 : vector<8x128xf32>
    %c0_24 = arith.constant 0 : index
    %c0_25 = arith.constant 0 : index
    %74 = vector.load %arg4[%c0_24, %c0_25] : memref<1x128xf32, #tpu.memory_space<vmem>>, vector<1x128xf32>
    %75 = vector.broadcast %74 : vector<1x128xf32> to vector<8x128xf32>
    %76 = arith.addf %73, %75 : vector<8x128xf32>
    %cst_26 = arith.constant 0.000000e+00 : f32
    %77 = vector.broadcast %cst_26 : f32 to vector<8x128xf32>
    %78 = arith.maximumf %76, %77 : vector<8x128xf32>
    %79 = arith.truncf %78 : vector<8x128xf32> to vector<8x128xbf16>
    %c0_27 = arith.constant 0 : index
    %c0_28 = arith.constant 0 : index
    %80 = vector.load %arg5[%c0_27, %c0_28] : memref<128x5xbf16, #tpu.memory_space<vmem>>, vector<128x5xbf16>
    %cst_29 = arith.constant dense<0.000000e+00> : vector<8x5xf32>
    %81 = tpu.matmul %79, %80, %cst_29 {dimension_numbers = #tpu.dot_dimension_numbers<[1], [0], [0], [1], [0, 0, 1, 1], [], []>} : vector<8x128xbf16>, vector<128x5xbf16>, vector<8x5xf32> -> vector<8x5xf32>
    %c0_30 = arith.constant 0 : index
    %c0_31 = arith.constant 0 : index
    %82 = vector.load %arg6[%c0_30, %c0_31] : memref<1x5xf32, #tpu.memory_space<vmem>>, vector<1x5xf32>
    %83 = vector.broadcast %82 : vector<1x5xf32> to vector<8x5xf32>
    %84 = arith.addf %81, %83 : vector<8x5xf32>
    %85 = arith.negf %84 : vector<8x5xf32>
    %86 = math.exp %85 : vector<8x5xf32>
    %cst_32 = arith.constant 1.000000e+00 : f32
    %87 = vector.broadcast %cst_32 : f32 to vector<8x5xf32>
    %88 = arith.addf %87, %86 : vector<8x5xf32>
    %89 = arith.divf %87, %88 : vector<8x5xf32>
    %c0_33 = arith.constant 0 : index
    %c0_34 = arith.constant 0 : index
    %90 = vector.load %arg7[%c0_33, %c0_34] : memref<8x5xf32, #tpu.memory_space<vmem>>, vector<8x5xf32>
    tpu.vector_store %arg7[%c0_33, %c0_34], %89 {strides = array<i32>} : memref<8x5xf32, #tpu.memory_space<vmem>>, vector<8x5xf32>,
    return
  }
  func.func @transform_0(%arg0: i32) -> (i32, i32) {
    %c0_i32 = arith.constant 0 : i32
    %c0_i32_0 = arith.constant 0 : i32
    return %arg0, %c0_i32 : i32, i32
  }
  func.func @transform_1(%arg0: i32) -> (i32, i32) {
    %c0_i32 = arith.constant 0 : i32
    %c0_i32_0 = arith.constant 0 : i32
    %c0_i32_1 = arith.constant 0 : i32
    return %c0_i32, %c0_i32_0 : i32, i32
  }
  func.func @transform_2(%arg0: i32) -> (i32, i32) {
    %c0_i32 = arith.constant 0 : i32
    %c0_i32_0 = arith.constant 0 : i32
    %c0_i32_1 = arith.constant 0 : i32
    return %c0_i32, %c0_i32_0 : i32, i32
  }
  func.func @transform_3(%arg0: i32) -> (i32, i32) {
    %c0_i32 = arith.constant 0 : i32
    %c0_i32_0 = arith.constant 0 : i32
    %c0_i32_1 = arith.constant 0 : i32
    return %c0_i32, %c0_i32_0 : i32, i32
  }
  func.func @transform_4(%arg0: i32) -> (i32, i32) {
    %c0_i32 = arith.constant 0 : i32
    %c0_i32_0 = arith.constant 0 : i32
    %c0_i32_1 = arith.constant 0 : i32
    return %c0_i32, %c0_i32_0 : i32, i32
  }
  func.func @transform_5(%arg0: i32) -> (i32, i32) {
    %c0_i32 = arith.constant 0 : i32
    %c0_i32_0 = arith.constant 0 : i32
    %c0_i32_1 = arith.constant 0 : i32
    return %c0_i32, %c0_i32_0 : i32, i32
  }
  func.func @transform_6(%arg0: i32) -> (i32, i32) {
    %c0_i32 = arith.constant 0 : i32
    %c0_i32_0 = arith.constant 0 : i32
    return %arg0, %c0_i32 : i32, i32
  }
}

</mosaic_0001>

<llo_original>
// kernel: tpu_custom_call.1
$region0: #{tpu_custom_call.1}
  #allocation0 [shape = 'u32[]', space=smem, size = 0x4, offset = 0x4, fixed_abs, tag = 'smem constant byte address 0x4 - core index']
  #allocation1 [shape = 'u32[144,128]{1,0:T(1,128)}', space=vmem, size = 0x12000, scoped, tag = 'internal scratch']
  %s0 = inlined_call_operand.hbm [shape: bf16[32,2048], index: 0, kind: input, shape index: {}]
  %s1 = inlined_call_operand.vmem [shape: bf16[128,128], index: 1, kind: input, shape index: {}]
  %s2 = inlined_call_operand.hbm [shape: bf16[128,128], index: 2, kind: input, shape index: {}]
  %s3 = inlined_call_operand.vmem [shape: f32[1,128], index: 3, kind: input, shape index: {}]
  %s4 = inlined_call_operand.vmem [shape: bf16[128,5], index: 4, kind: input, shape index: {}]
  %s5 = inlined_call_operand.vmem [shape: f32[1,5], index: 5, kind: input, shape index: {}]
  %s6 = inlined_call_operand.vmem [shape: f32[32,5], index: 6, kind: output, shape index: {}]
  %s7 = sld [smem:[#allocation0]]
  $region65: #{tpu_custom_call.1} parent=0
    _
  %s9 = ssub.s32 1, %s7
  %s10 = scalar_select 0, %s9, %s7
  $region1: #{tpu_custom_call.1} parent=0
    #allocation2 [shape = 'u8[65536]{0}', space=vmem, size = 0x10000, scoped, tag = 'input window, operand 0']
    #allocation3 [shape = 's32[2]{0}', space=sflag, size = 0x8, scoped, tag = 'scoped memory for tpu_custom_call.1']
    #allocation4 [shape = 'u8[32768]{0}', space=vmem, size = 0x8000, scoped, tag = 'input window, operand 2, single buffered']
    #allocation5 [shape = 's32[1]{0}', space=sflag, size = 0x4, scoped, tag = 'scoped memory for tpu_custom_call.1']
    %11 = vsyncpa [#allocation3], 0
    %s12 = scalar_lea.sflag [#allocation3], 1
    %13 = vsyncpa %s12, 0
    %14 = vsyncpa [#allocation5], 0
    loop: start=0, step=1, limit=6
    $region2: #{tpu_custom_call.1} parent=1 // loop_pre_header
      _
    $region3: #{tpu_custom_call.1} parent=1 // loop_header
      %s16 = sphi 0, %s20
      %p17 = scmp.ge.s32.totalorder %s16, 6
      %s26 = sphi 0, %s28
      %s29 = sphi 0, %s26
      %s30 = sphi 0, %s29
      %s46 = sphi 0, %s30
      %s50 = sphi 0, %s50
      %s52 = sphi 0, %s50
      %s53 = sphi 0, %s52
      %s67 = sphi 0, %s53
      %s71 = sphi 0, %s71
      %s73 = sphi 0, %s71
      %s74 = sphi 0, %s73
      %s88 = sphi 0, %s74
      %s92 = sphi 0, %s92
      %s94 = sphi 0, %s92
      %s95 = sphi 0, %s94
      %s109 = sphi 0, %s95
      %s113 = sphi 0, %s113
      %s115 = sphi 0, %s113
      %s116 = sphi 0, %s115
      %s130 = sphi 0, %s116
      %s134 = sphi 0, %s134
      %s136 = sphi 0, %s134
      %s137 = sphi 0, %s136
      %s151 = sphi 0, %s137
      %s157 = sphi 0, %s159
      %s160 = sphi 0, %s157
      %s161 = sphi 0, %s160
      %s177 = sphi 0, %s161
    $region4: #{tpu_custom_call.1} parent=1 // loop_header_branch
      %19 = sbr.rel (%p17) target = $region8
    $region5: #{tpu_custom_call.1} parent=1 // loop_body
      %s21 = ssub.s32 %s16, 1
      %s22 = ssub.s32 %s16, 2
      %s23 = sadd.s32 %s16, 1
      %s24 = ssub.s32 %s16, %s23
      %p25 = scmp.eq.s32.totalorder %s24, 0
      %s27 = sadd.s32 %s26, 1
      %s28 = scalar_select %p25, %s26, %s27
      %p31 = pneg %p25
      %p32 = scmp.eq.s32.totalorder %s16, 3
      %p33 = por %p31, %p32
      %p34 = scmp.ne.s32.totalorder %s26, %s29
      %p35 = scmp.eq.s32.totalorder %s16, 0
      %p36 = por %p34, %p35
      %p37 = scmp.ne.s32.totalorder %s26, %s29
      %p38 = scmp.eq.s32.totalorder %s21, 3
      %p39 = por %p37, %p38
      %p40 = scmp.ne.s32.totalorder %s29, %s30
      %p41 = scmp.eq.s32.totalorder %s21, 0
      %p42 = por %p40, %p41
      %p43 = scmp.ne.s32.totalorder %s29, %s30
      %p44 = scmp.eq.s32.totalorder %s22, 3
      %p45 = por %p43, %p44
      %p47 = scmp.ne.s32.totalorder %s30, %s46
      %p48 = scmp.eq.s32.totalorder %s22, 0
      %p49 = por %p47, %p48
      %s51 = sadd.s32 %s50, 1
      %p54 = scmp.eq.s32.totalorder %s16, 3
      %p55 = scmp.ne.s32.totalorder %s50, %s52
      %p56 = scmp.eq.s32.totalorder %s16, 0
      %p57 = por %p55, %p56
      %p58 = scmp.ne.s32.totalorder %s50, %s52
      %p59 = scmp.eq.s32.totalorder %s21, 3
      %p60 = por %p58, %p59
      %p61 = scmp.ne.s32.totalorder %s52, %s53
      %p62 = scmp.eq.s32.totalorder %s21, 0
      %p63 = por %p61, %p62
      %p64 = scmp.ne.s32.totalorder %s52, %s53
      %p65 = scmp.eq.s32.totalorder %s22, 3
      %p66 = por %p64, %p65
      %p68 = scmp.ne.s32.totalorder %s53, %s67
      %p69 = scmp.eq.s32.totalorder %s22, 0
      %p70 = por %p68, %p69
      %s72 = sadd.s32 %s71, 1
      %p75 = scmp.eq.s32.totalorder %s16, 3
      %p76 = scmp.ne.s32.totalorder %s71, %s73
      %p77 = scmp.eq.s32.totalorder %s16, 0
      %p78 = por %p76, %p77
      %p79 = scmp.ne.s32.totalorder %s71, %s73
      %p80 = scmp.eq.s32.totalorder %s21, 3
      %p81 = por %p79, %p80
      %p82 = scmp.ne.s32.totalorder %s73, %s74
      %p83 = scmp.eq.s32.totalorder %s21, 0
      %p84 = por %p82, %p83
      %p85 = scmp.ne.s32.totalorder %s73, %s74
      %p86 = scmp.eq.s32.totalorder %s22, 3
      %p87 = por %p85, %p86
      %p89 = scmp.ne.s32.totalorder %s74, %s88
      %p90 = scmp.eq.s32.totalorder %s22, 0
      %p91 = por %p89, %p90
      %s93 = sadd.s32 %s92, 1
      %p96 = scmp.eq.s32.totalorder %s16, 3
      %p97 = scmp.ne.s32.totalorder %s92, %s94
      %p98 = scmp.eq.s32.totalorder %s16, 0
      %p99 = por %p97, %p98
      %p100 = scmp.ne.s32.totalorder %s92, %s94
      %p101 = scmp.eq.s32.totalorder %s21, 3
      %p102 = por %p100, %p101
      %p103 = scmp.ne.s32.totalorder %s94, %s95
      %p104 = scmp.eq.s32.totalorder %s21, 0
      %p105 = por %p103, %p104
      %p106 = scmp.ne.s32.totalorder %s94, %s95
      %p107 = scmp.eq.s32.totalorder %s22, 3
      %p108 = por %p106, %p107
      %p110 = scmp.ne.s32.totalorder %s95, %s109
      %p111 = scmp.eq.s32.totalorder %s22, 0
      %p112 = por %p110, %p111
      %s114 = sadd.s32 %s113, 1
      %p117 = scmp.eq.s32.totalorder %s16, 3
      %p118 = scmp.ne.s32.totalorder %s113, %s115
      %p119 = scmp.eq.s32.totalorder %s16, 0
      %p120 = por %p118, %p119
      %p121 = scmp.ne.s32.totalorder %s113, %s115
      %p122 = scmp.eq.s32.totalorder %s21, 3
      %p123 = por %p121, %p122
      %p124 = scmp.ne.s32.totalorder %s115, %s116
      %p125 = scmp.eq.s32.totalorder %s21, 0
      %p126 = por %p124, %p125
      %p127 = scmp.ne.s32.totalorder %s115, %s116
      %p128 = scmp.eq.s32.totalorder %s22, 3
      %p129 = por %p127, %p128
      %p131 = scmp.ne.s32.totalorder %s116, %s130
      %p132 = scmp.eq.s32.totalorder %s22, 0
      %p133 = por %p131, %p132
      %s135 = sadd.s32 %s134, 1
      %p138 = scmp.eq.s32.totalorder %s16, 3
      %p139 = scmp.ne.s32.totalorder %s134, %s136
      %p140 = scmp.eq.s32.totalorder %s16, 0
      %p141 = por %p139, %p140
      %p142 = scmp.ne.s32.totalorder %s134, %s136
      %p143 = scmp.eq.s32.totalorder %s21, 3
      %p144 = por %p142, %p143
      %p145 = scmp.ne.s32.totalorder %s136, %s137
      %p146 = scmp.eq.s32.totalorder %s21, 0
      %p147 = por %p145, %p146
      %p148 = scmp.ne.s32.totalorder %s136, %s137
      %p149 = scmp.eq.s32.totalorder %s22, 3
      %p150 = por %p148, %p149
      %p152 = scmp.ne.s32.totalorder %s137, %s151
      %p153 = scmp.eq.s32.totalorder %s22, 0
      %p154 = por %p152, %p153
      %s155 = ssub.s32 %s16, %s23
      %p156 = scmp.eq.s32.totalorder %s155, 0
      %s158 = sadd.s32 %s157, 1
      %s159 = scalar_select %p156, %s157, %s158
      %p162 = pneg %p156
      %p163 = scmp.eq.s32.totalorder %s16, 3
      %p164 = por %p162, %p163
      %p165 = scmp.ne.s32.totalorder %s157, %s160
      %p166 = scmp.eq.s32.totalorder %s16, 0
      %p167 = por %p165, %p166
      %p168 = scmp.ne.s32.totalorder %s157, %s160
      %p169 = scmp.eq.s32.totalorder %s21, 3
      %p170 = por %p168, %p169
      %p171 = scmp.ne.s32.totalorder %s160, %s161
      %p172 = scmp.eq.s32.totalorder %s21, 0
      %p173 = por %p171, %p172
      %p174 = scmp.ne.s32.totalorder %s160, %s161
      %p175 = scmp.eq.s32.totalorder %s22, 3
      %p176 = por %p174, %p175
      %p178 = scmp.ne.s32.totalorder %s161, %s177
      %p179 = scmp.eq.s32.totalorder %s22, 0
      %p180 = por %p178, %p179
      %p181 = scmp.le.s32.totalorder 1, %s16
      %p182 = scmp.lt.s32.totalorder %s16, 5
      %p183 = pnand %p181, %p182
      %p184 = pneg %p183
      // Predicated region
      $region9: #{tpu_custom_call.1} parent=5 // pred_check
        _
      $region10: #{tpu_custom_call.1} parent=5 // pred_check_branch
        %186 = sbr.rel (%p183) target = $region12
      $region11: #{tpu_custom_call.1} parent=5 // pred_region
        %s187 = ssub.s32 %s16, 1
        // Predicated region
        $region13: #{tpu_custom_call.1} parent=11 // pred_check
          %p188 = pneg %p63
        $region14: #{tpu_custom_call.1} parent=11 // pred_check_branch
          %190 = sbr.rel (%p188) target = $region16
        $region15: #{tpu_custom_call.1} parent=11 // pred_region
          _
        $region16: #{tpu_custom_call.1} parent=11 // pred_fallthru
          _
        // Predicated region
        $region17: #{tpu_custom_call.1} parent=11 // pred_check
          %p191 = pneg %p84
        $region18: #{tpu_custom_call.1} parent=11 // pred_check_branch
          %193 = sbr.rel (%p191) target = $region20
        $region19: #{tpu_custom_call.1} parent=11 // pred_region
          %s195 = ssub.s32 1024, 1024
          %196 = vsyncadd [#allocation5], %s195
          %s197 = sshll.u32 [#allocation4], 4
          %s198 = int_to_ptr.vmem [resolvable:$true] %s197
          %203 = dma.hbm_to_vmem [thread:$0]  %s2, 1024, %s198, [#allocation5], 64, 64, 4
        $region20: #{tpu_custom_call.1} parent=11 // pred_fallthru
          _
        // Predicated region
        $region21: #{tpu_custom_call.1} parent=11 // pred_check
          %p204 = pneg %p105
        $region22: #{tpu_custom_call.1} parent=11 // pred_check_branch
          %206 = sbr.rel (%p204) target = $region24
        $region23: #{tpu_custom_call.1} parent=11 // pred_region
          _
        $region24: #{tpu_custom_call.1} parent=11 // pred_fallthru
          _
        // Predicated region
        $region25: #{tpu_custom_call.1} parent=11 // pred_check
          %p207 = pneg %p126
        $region26: #{tpu_custom_call.1} parent=11 // pred_check_branch
          %209 = sbr.rel (%p207) target = $region28
        $region27: #{tpu_custom_call.1} parent=11 // pred_region
          _
        $region28: #{tpu_custom_call.1} parent=11 // pred_fallthru
          _
        // Predicated region
        $region29: #{tpu_custom_call.1} parent=11 // pred_check
          %p210 = pneg %p147
        $region30: #{tpu_custom_call.1} parent=11 // pred_check_branch
          %212 = sbr.rel (%p210) target = $region32
        $region31: #{tpu_custom_call.1} parent=11 // pred_region
          _
        $region32: #{tpu_custom_call.1} parent=11 // pred_fallthru
          _
      $region12: #{tpu_custom_call.1} parent=5 // pred_fallthru
        _
      %p213 = scmp.lt.s32.totalorder %s16, 4
      // Predicated region
      $region33: #{tpu_custom_call.1} parent=5 // pred_check
        %p214 = pneg %p213
      $region34: #{tpu_custom_call.1} parent=5 // pred_check_branch
        %216 = sbr.rel (%p214) target = $region36
      $region35: #{tpu_custom_call.1} parent=5 // pred_region
        // Predicated region
        $region37: #{tpu_custom_call.1} parent=35 // pred_check
          %p217 = pneg %p36
        $region38: #{tpu_custom_call.1} parent=35 // pred_check_branch
          %219 = sbr.rel (%p217) target = $region40
        $region39: #{tpu_custom_call.1} parent=35 // pred_region
          %s220 = sand.u32 %s26, 1
          %s221 = scalar_lea.sflag [#allocation3], %s220
          %s222 = sand.u32 %s26, 1
          %s223 = smul.addr %s222, 64
          %s224 = scalar_lea.vmem [#allocation2], %s223
          %s226 = ssub.s32 1024, 1024
          %227 = vsyncadd %s221, %s226
          %s228 = smul.addr %s16, 16
          %s229 = smul.addr %s228, 64
          %s230 = scalar_lea.hbm %s0, %s229
          %s232 = sshll.u32 %s224, 4
          %s233 = int_to_ptr.vmem [resolvable:$true] %s232
          %235 = dma.hbm_to_vmem [thread:$0]  %s230, 1024, %s233, %s221
        $region40: #{tpu_custom_call.1} parent=35 // pred_fallthru
          _
      $region36: #{tpu_custom_call.1} parent=5 // pred_fallthru
        _
      %p236 = scmp.le.s32.totalorder 1, %s16
      %p237 = scmp.lt.s32.totalorder %s16, 5
      %p238 = pnand %p236, %p237
      %p239 = pneg %p238
      // Predicated region
      $region41: #{tpu_custom_call.1} parent=5 // pred_check
        _
      $region42: #{tpu_custom_call.1} parent=5 // pred_check_branch
        %241 = sbr.rel (%p238) target = $region44
      $region43: #{tpu_custom_call.1} parent=5 // pred_region
        %s242 = ssub.s32 %s16, 1
        %s243 = sand.u32 %s29, 1
        %s244 = scalar_lea.sflag [#allocation3], %s243
        %s245 = sand.u32 %s29, 1
        %s246 = smul.addr %s245, 64
        %s247 = scalar_lea.vmem [#allocation2], %s246
        // Predicated region
        $region45: #{tpu_custom_call.1} parent=43 // pred_check
          %p248 = pneg %p42
        $region46: #{tpu_custom_call.1} parent=43 // pred_check_branch
          %250 = sbr.rel (%p248) target = $region48
        $region47: #{tpu_custom_call.1} parent=43 // pred_region
          %251 = dma.done %s244, 1024
        $region48: #{tpu_custom_call.1} parent=43 // pred_fallthru
          _
        // Predicated region
        $region49: #{tpu_custom_call.1} parent=43 // pred_check
          %p252 = pneg %p84
        $region50: #{tpu_custom_call.1} parent=43 // pred_check_branch
          %254 = sbr.rel (%p252) target = $region52
        $region51: #{tpu_custom_call.1} parent=43 // pred_region
          %255 = dma.done [#allocation5], 1024
        $region52: #{tpu_custom_call.1} parent=43 // pred_fallthru
          _
        %s256 = sand.u32 %s29, 1
        %s257 = scalar_lea.sflag [#allocation3], %s256
        %s258 = sand.u32 %s29, 1
        %s259 = smul.addr %s258, 64
        %s260 = scalar_lea.vmem [#allocation2], %s259
        %p261 = pneg %p42
        %p262 = pneg %p39
        %p263 = pneg %p63
        %p264 = pneg %p60
        %p265 = pneg %p84
        %p266 = pneg %p81
        %p267 = pneg %p105
        %p268 = pneg %p102
        %p269 = pneg %p126
        %p270 = pneg %p123
        %p271 = pneg %p147
        %p272 = pneg %p144
        %p273 = pneg %p173
        %p274 = pneg %p170
        %p275 = scmp.lt.s32.totalorder %s21, 3
        %s276 = scalar_select %p275, %s21, 3
        %s277 = smul.addr %s276, 8
        %s278 = scalar_lea.vmem %s6, %s277
        %p279 = scmp.lt.s32.totalorder %s21, 3
        %s280 = scalar_select %p279, %s21, 3
        %s281 = smul.addr %s280, 8
        %s282 = scalar_lea.vmem %s6, %s281
        %v284 = vld [vmem:[%s247] sm:$0xf]
        %v285 = vunpack.c.l.bf16 %v284
        %v286 = vld [vmem:[%s247 + $0x4] sm:$0xf]
        %v287 = vunpack.c.l.bf16 %v286
        %v288 = vadd.f32 %v285, %v287
        %v289 = vmax.bf16 %v284, %v286
        %v290 = vld [vmem:[%s247 + $0x8] sm:$0xf]
        %v291 = vunpack.c.l.bf16 %v290
        %v292 = vadd.f32 %v288, %v291
        %v293 = vmax.bf16 %v289, %v290
        %v294 = vld [vmem:[%s247 + $0xc] sm:$0xf]
        %v295 = vunpack.c.l.bf16 %v294
        %v296 = vadd.f32 %v292, %v295
        %v297 = vmax.bf16 %v293, %v294
        %v298 = vld [vmem:[%s247 + $0x10] sm:$0xf]
        %v299 = vunpack.c.l.bf16 %v298
        %v300 = vadd.f32 %v296, %v299
        %v301 = vmax.bf16 %v297, %v298
        %v302 = vld [vmem:[%s247 + $0x14] sm:$0xf]
        %v303 = vunpack.c.l.bf16 %v302
        %v304 = vadd.f32 %v300, %v303
        %v305 = vmax.bf16 %v301, %v302
        %v306 = vld [vmem:[%s247 + $0x18] sm:$0xf]
        %v307 = vunpack.c.l.bf16 %v306
        %v308 = vadd.f32 %v304, %v307
        %v309 = vmax.bf16 %v305, %v306
        %v310 = vld [vmem:[%s247 + $0x1c] sm:$0xf]
        %v311 = vunpack.c.l.bf16 %v310
        %v312 = vadd.f32 %v308, %v311
        %v313 = vmax.bf16 %v309, %v310
        %v314 = vadd.f32 %v312, 0.0
        %v315 = vld [vmem:[%s247 + $0x20] sm:$0xf]
        %v316 = vunpack.c.l.bf16 %v315
        %v317 = vld [vmem:[%s247 + $0x24] sm:$0xf]
        %v318 = vunpack.c.l.bf16 %v317
        %v319 = vadd.f32 %v316, %v318
        %v320 = vmax.bf16 %v315, %v317
        %v321 = vld [vmem:[%s247 + $0x28] sm:$0xf]
        %v322 = vunpack.c.l.bf16 %v321
        %v323 = vadd.f32 %v319, %v322
        %v324 = vmax.bf16 %v320, %v321
        %v325 = vld [vmem:[%s247 + $0x2c] sm:$0xf]
        %v326 = vunpack.c.l.bf16 %v325
        %v327 = vadd.f32 %v323, %v326
        %v328 = vmax.bf16 %v324, %v325
        %v329 = vld [vmem:[%s247 + $0x30] sm:$0xf]
        %v330 = vunpack.c.l.bf16 %v329
        %v331 = vadd.f32 %v327, %v330
        %v332 = vmax.bf16 %v328, %v329
        %v333 = vld [vmem:[%s247 + $0x34] sm:$0xf]
        %v334 = vunpack.c.l.bf16 %v333
        %v335 = vadd.f32 %v331, %v334
        %v336 = vmax.bf16 %v332, %v333
        %v337 = vld [vmem:[%s247 + $0x38] sm:$0xf]
        %v338 = vunpack.c.l.bf16 %v337
        %v339 = vadd.f32 %v335, %v338
        %v340 = vmax.bf16 %v336, %v337
        %v341 = vld [vmem:[%s247 + $0x3c] sm:$0xf]
        %v342 = vunpack.c.l.bf16 %v341
        %v343 = vadd.f32 %v339, %v342
        %v344 = vmax.bf16 %v340, %v341
        %v345 = vadd.f32 %v314, %v343
        %v346 = vmax.bf16 %v313, %v344
        %v347 = vmul.f32 %v345, 0.0625
        %v348 = vpack.c.bf16 %v347, %v347
        %v349 = vld [vmem:[%s1] sm:$0xf]
        %v350 = vld [vmem:[%s1 + $0x4] sm:$0xf]
        %v351 = vld [vmem:[%s1 + $0x8] sm:$0xf]
        %v352 = vld [vmem:[%s1 + $0xc] sm:$0xf]
        %v353 = vld [vmem:[%s1 + $0x10] sm:$0xf]
        %v354 = vld [vmem:[%s1 + $0x14] sm:$0xf]
        %v355 = vld [vmem:[%s1 + $0x18] sm:$0xf]
        %v356 = vld [vmem:[%s1 + $0x1c] sm:$0xf]
        %v357 = vld [vmem:[%s1 + $0x20] sm:$0xf]
        %v358 = vld [vmem:[%s1 + $0x24] sm:$0xf]
        %v359 = vld [vmem:[%s1 + $0x28] sm:$0xf]
        %v360 = vld [vmem:[%s1 + $0x2c] sm:$0xf]
        %v361 = vld [vmem:[%s1 + $0x30] sm:$0xf]
        %v362 = vld [vmem:[%s1 + $0x34] sm:$0xf]
        %v363 = vld [vmem:[%s1 + $0x38] sm:$0xf]
        %v364 = vld [vmem:[%s1 + $0x3c] sm:$0xf]
        %v365 = vld [vmem:[#allocation4] sm:$0xf]
        %v366 = vld [vmem:[#allocation4 + $0x4] sm:$0xf]
        %v367 = vld [vmem:[#allocation4 + $0x8] sm:$0xf]
        %v368 = vld [vmem:[#allocation4 + $0xc] sm:$0xf]
        %v369 = vld [vmem:[#allocation4 + $0x10] sm:$0xf]
        %v370 = vld [vmem:[#allocation4 + $0x14] sm:$0xf]
        %v371 = vld [vmem:[#allocation4 + $0x18] sm:$0xf]
        %v372 = vld [vmem:[#allocation4 + $0x1c] sm:$0xf]
        %v373 = vld [vmem:[#allocation4 + $0x20] sm:$0xf]
        %v374 = vld [vmem:[#allocation4 + $0x24] sm:$0xf]
        %v375 = vld [vmem:[#allocation4 + $0x28] sm:$0xf]
        %v376 = vld [vmem:[#allocation4 + $0x2c] sm:$0xf]
        %v377 = vld [vmem:[#allocation4 + $0x30] sm:$0xf]
        %v378 = vld [vmem:[#allocation4 + $0x34] sm:$0xf]
        %v379 = vld [vmem:[#allocation4 + $0x38] sm:$0xf]
        %v380 = vld [vmem:[#allocation4 + $0x3c] sm:$0xf]
        %v397 = vunpack.c.l.b16 %v365
        %v398 = vunpack.c.l.b16 %v366
        %v399 = vunpack.c.l.b16 %v367
        %v400 = vunpack.c.l.b16 %v368
        %v401 = vunpack.c.l.b16 %v369
        %v402 = vunpack.c.l.b16 %v370
        %v403 = vunpack.c.l.b16 %v371
        %v404 = vunpack.c.l.b16 %v372
        %v405 = vunpack.c.l.b16 %v373
        %v406 = vunpack.c.l.b16 %v374
        %v407 = vunpack.c.l.b16 %v375
        %v408 = vunpack.c.l.b16 %v376
        %v409 = vunpack.c.l.b16 %v377
        %v410 = vunpack.c.l.b16 %v378
        %v411 = vunpack.c.l.b16 %v379
        %v412 = vunpack.c.l.b16 %v380
        %v413 = vpack.c.b16 %v398, %v397
        %v414 = vpack.c.b16 %v400, %v399
        %v415 = vpack.c.b16 %v402, %v401
        %v416 = vpack.c.b16 %v404, %v403
        %v417 = vpack.c.b16 %v406, %v405
        %v418 = vpack.c.b16 %v408, %v407
        %v419 = vpack.c.b16 %v410, %v409
        %v420 = vpack.c.b16 %v412, %v411
        %429 = vmatprep.subr.bf16.mxu0 0
        %430 = vmatpush1.bf16.msra.mxu0 %v413
        %431 = vmatprep.subr.bf16.mxu0 0
        %432 = vmatpush1.bf16.msra.mxu0 %v414
        %433 = vmatprep.subr.bf16.mxu0 0
        %434 = vmatpush1.bf16.msra.mxu0 %v415
        %435 = vmatprep.subr.bf16.mxu0 0
        %436 = vmatpush1.bf16.msra.mxu0 %v416
        %437 = vmatprep.subr.bf16.mxu0 0
        %438 = vmatpush1.bf16.msra.mxu0 %v417
        %439 = vmatprep.subr.bf16.mxu0 0
        %440 = vmatpush1.bf16.msra.mxu0 %v418
        %441 = vmatprep.subr.bf16.mxu0 0
        %442 = vmatpush1.bf16.msra.mxu0 %v419
        %443 = vmatprep.subr.bf16.mxu0 0
        %444 = vmatpush1.bf16.msra.mxu0 %v420
        %445 = vmatprep.subr.bf16.mxu0 0
        %446 = vmatpush1.bf16.msra.mxu0 0
        %447 = vmatprep.subr.bf16.mxu0 0
        %448 = vmatpush1.bf16.msra.mxu0 0
        %449 = vmatprep.subr.bf16.mxu0 0
        %450 = vmatpush1.bf16.msra.mxu0 0
        %451 = vmatprep.subr.bf16.mxu0 0
        %452 = vmatpush1.bf16.msra.mxu0 0
        %453 = vmatprep.subr.bf16.mxu0 0
        %454 = vmatpush1.bf16.msra.mxu0 0
        %455 = vmatprep.subr.bf16.mxu0 0
        %456 = vmatpush1.bf16.msra.mxu0 0
        %457 = vmatprep.subr.bf16.mxu0 0
        %458 = vmatpush1.bf16.msra.mxu0 0
        %459 = vmatprep.subr.bf16.mxu0 0
        %460 = vmatpush1.bf16.msra.mxu0 0
        %461 = vmatprep.mubr.bf16.mxu0 0
        %462 = vmatmul.mubr.bf16.gmra.mrb[0].mxu0 %v346
        %v463 = vpop.f32.mrb[0].mxu0
        %v464 = vadd.f32 0.0, %v463
        %v465 = vpop.f32.mrb[0].mxu0
        %v466 = vpop.f32.mrb[0].mxu0
        %v467 = vpop.f32.mrb[0].mxu0
        %468 = vdwg.mxu0
        %v485 = vunpack.c.l.b16 %v349
        %v486 = vunpack.c.l.b16 %v350
        %v487 = vunpack.c.l.b16 %v351
        %v488 = vunpack.c.l.b16 %v352
        %v489 = vunpack.c.l.b16 %v353
        %v490 = vunpack.c.l.b16 %v354
        %v491 = vunpack.c.l.b16 %v355
        %v492 = vunpack.c.l.b16 %v356
        %v493 = vunpack.c.l.b16 %v357
        %v494 = vunpack.c.l.b16 %v358
        %v495 = vunpack.c.l.b16 %v359
        %v496 = vunpack.c.l.b16 %v360
        %v497 = vunpack.c.l.b16 %v361
        %v498 = vunpack.c.l.b16 %v362
        %v499 = vunpack.c.l.b16 %v363
        %v500 = vunpack.c.l.b16 %v364
        %v501 = vpack.c.b16 %v486, %v485
        %v502 = vpack.c.b16 %v488, %v487
        %v503 = vpack.c.b16 %v490, %v489
        %v504 = vpack.c.b16 %v492, %v491
        %v505 = vpack.c.b16 %v494, %v493
        %v506 = vpack.c.b16 %v496, %v495
        %v507 = vpack.c.b16 %v498, %v497
        %v508 = vpack.c.b16 %v500, %v499
        %517 = vmatprep.subr.bf16.mxu0 0
        %518 = vmatpush1.bf16.msra.mxu0 %v501
        %519 = vmatprep.subr.bf16.mxu0 0
        %520 = vmatpush1.bf16.msra.mxu0 %v502
        %521 = vmatprep.subr.bf16.mxu0 0
        %522 = vmatpush1.bf16.msra.mxu0 %v503
        %523 = vmatprep.subr.bf16.mxu0 0
        %524 = vmatpush1.bf16.msra.mxu0 %v504
        %525 = vmatprep.subr.bf16.mxu0 0
        %526 = vmatpush1.bf16.msra.mxu0 %v505
        %527 = vmatprep.subr.bf16.mxu0 0
        %528 = vmatpush1.bf16.msra.mxu0 %v506
        %529 = vmatprep.subr.bf16.mxu0 0
        %530 = vmatpush1.bf16.msra.mxu0 %v507
        %531 = vmatprep.subr.bf16.mxu0 0
        %532 = vmatpush1.bf16.msra.mxu0 %v508
        %533 = vmatprep.subr.bf16.mxu0 0
        %534 = vmatpush1.bf16.msra.mxu0 0
        %535 = vmatprep.subr.bf16.mxu0 0
        %536 = vmatpush1.bf16.msra.mxu0 0
        %537 = vmatprep.subr.bf16.mxu0 0
        %538 = vmatpush1.bf16.msra.mxu0 0
        %539 = vmatprep.subr.bf16.mxu0 0
        %540 = vmatpush1.bf16.msra.mxu0 0
        %541 = vmatprep.subr.bf16.mxu0 0
        %542 = vmatpush1.bf16.msra.mxu0 0
        %543 = vmatprep.subr.bf16.mxu0 0
        %544 = vmatpush1.bf16.msra.mxu0 0
        %545 = vmatprep.subr.bf16.mxu0 0
        %546 = vmatpush1.bf16.msra.mxu0 0
        %547 = vmatprep.subr.bf16.mxu0 0
        %548 = vmatpush1.bf16.msra.mxu0 0
        %549 = vmatprep.mubr.bf16.mxu0 0
        %550 = vmatmul.mubr.bf16.gmra.mrb[0].mxu0 %v348
        %v551 = vpop.f32.mrb[0].mxu0
        %v552 = vadd.f32 %v464, %v551
        %v553 = vpop.f32.mrb[0].mxu0
        %v554 = vpop.f32.mrb[0].mxu0
        %v555 = vpop.f32.mrb[0].mxu0
        %556 = vdwg.mxu0
        %v557 = vld [vmem:[%s3] sm:$0x1]
        %v559 = vlaneseq
        %v560 = vshrl.u32 %v559, 7
        %v561 = vsub.s32 0, %v560
        %v562 = vrot.slane %v557, %v561
        %v564 = vadd.f32 %v552, %v562
        %v565 = vmax.f32 %v564, 0.0
        %v566 = vpack.c.bf16 %v565, %v565
        %v567 = vld [vmem:[%s4] sm:$0xf]
        %v568 = vld [vmem:[%s4 + $0x4] sm:$0xf]
        %v569 = vld [vmem:[%s4 + $0x8] sm:$0xf]
        %v570 = vld [vmem:[%s4 + $0xc] sm:$0xf]
        %v571 = vld [vmem:[%s4 + $0x10] sm:$0xf]
        %v572 = vld [vmem:[%s4 + $0x14] sm:$0xf]
        %v573 = vld [vmem:[%s4 + $0x18] sm:$0xf]
        %v574 = vld [vmem:[%s4 + $0x1c] sm:$0xf]
        %v575 = vld [vmem:[%s4 + $0x20] sm:$0xf]
        %v576 = vld [vmem:[%s4 + $0x24] sm:$0xf]
        %v577 = vld [vmem:[%s4 + $0x28] sm:$0xf]
        %v578 = vld [vmem:[%s4 + $0x2c] sm:$0xf]
        %v579 = vld [vmem:[%s4 + $0x30] sm:$0xf]
        %v580 = vld [vmem:[%s4 + $0x34] sm:$0xf]
        %v581 = vld [vmem:[%s4 + $0x38] sm:$0xf]
        %v582 = vld [vmem:[%s4 + $0x3c] sm:$0xf]
        %v583 = vld [vmem:[%s5] sm:$0x1]
        %v585 = vlaneseq
        %v586 = vshrl.u32 %v585, 7
        %v587 = vsub.s32 0, %v586
        %v588 = vrot.slane %v583, %v587
        %v606 = vunpack.c.l.b16 %v567
        %v607 = vunpack.c.l.b16 %v568
        %v608 = vunpack.c.l.b16 %v569
        %v609 = vunpack.c.l.b16 %v570
        %v610 = vunpack.c.l.b16 %v571
        %v611 = vunpack.c.l.b16 %v572
        %v612 = vunpack.c.l.b16 %v573
        %v613 = vunpack.c.l.b16 %v574
        %v614 = vunpack.c.l.b16 %v575
        %v615 = vunpack.c.l.b16 %v576
        %v616 = vunpack.c.l.b16 %v577
        %v617 = vunpack.c.l.b16 %v578
        %v618 = vunpack.c.l.b16 %v579
        %v619 = vunpack.c.l.b16 %v580
        %v620 = vunpack.c.l.b16 %v581
        %v621 = vunpack.c.l.b16 %v582
        %v622 = vpack.c.b16 %v607, %v606
        %v623 = vpack.c.b16 %v609, %v608
        %v624 = vpack.c.b16 %v611, %v610
        %v625 = vpack.c.b16 %v613, %v612
        %v626 = vpack.c.b16 %v615, %v614
        %v627 = vpack.c.b16 %v617, %v616
        %v628 = vpack.c.b16 %v619, %v618
        %v629 = vpack.c.b16 %v621, %v620
        %638 = vmatprep.subr.bf16.mxu0 0
        %639 = vmatpush1.bf16.msra.mxu0 %v622
        %640 = vmatprep.subr.bf16.mxu0 0
        %641 = vmatpush1.bf16.msra.mxu0 %v623
        %642 = vmatprep.subr.bf16.mxu0 0
        %643 = vmatpush1.bf16.msra.mxu0 %v624
        %644 = vmatprep.subr.bf16.mxu0 0
        %645 = vmatpush1.bf16.msra.mxu0 %v625
        %646 = vmatprep.subr.bf16.mxu0 0
        %647 = vmatpush1.bf16.msra.mxu0 %v626
        %648 = vmatprep.subr.bf16.mxu0 0
        %649 = vmatpush1.bf16.msra.mxu0 %v627
        %650 = vmatprep.subr.bf16.mxu0 0
        %651 = vmatpush1.bf16.msra.mxu0 %v628
        %652 = vmatprep.subr.bf16.mxu0 0
        %653 = vmatpush1.bf16.msra.mxu0 %v629
        %654 = vmatprep.subr.bf16.mxu0 0
        %655 = vmatpush1.bf16.msra.mxu0 0
        %656 = vmatprep.subr.bf16.mxu0 0
        %657 = vmatpush1.bf16.msra.mxu0 0
        %658 = vmatprep.subr.bf16.mxu0 0
        %659 = vmatpush1.bf16.msra.mxu0 0
        %660 = vmatprep.subr.bf16.mxu0 0
        %661 = vmatpush1.bf16.msra.mxu0 0
        %662 = vmatprep.subr.bf16.mxu0 0
        %663 = vmatpush1.bf16.msra.mxu0 0
        %664 = vmatprep.subr.bf16.mxu0 0
        %665 = vmatpush1.bf16.msra.mxu0 0
        %666 = vmatprep.subr.bf16.mxu0 0
        %667 = vmatpush1.bf16.msra.mxu0 0
        %668 = vmatprep.subr.bf16.mxu0 0
        %669 = vmatpush1.bf16.msra.mxu0 0
        %670 = vmatprep.mubr.bf16.mxu0 0
        %671 = vmatmul.mubr.bf16.gmra.mrb[0].mxu0 %v566
        %v672 = vpop.f32.mrb[0].mxu0
        %v673 = vadd.f32 %v588, %v672
        %v674 = vpop.f32.mrb[0].mxu0
        %v675 = vpop.f32.mrb[0].mxu0
        %v676 = vpop.f32.mrb[0].mxu0
        %677 = vdwg.mxu0
        %v678 = vxor.u32 %v673, 2147483648
        %v679 = vmul.f32 %v678, 1.442695
        %v680 = vpow.pop %v679
        %v681 = vadd.f32 %v680, 1.0
        %v682 = vrcp.pop %v681
        %v683 = vmul.f32 1.0, %v682
        %vm684 = vcmask 39936
        %685 = vst.msk [vmem:[%s282] sm:$0xff] %vm684, %v683
        %p686 = scmp.lt.s32.totalorder %s21, 3
        %s687 = scalar_select %p686, %s21, 3
        %s688 = smul.addr %s687, 8
        %s689 = scalar_lea.vmem %s6, %s688
        // Predicated region
        $region53: #{tpu_custom_call.1} parent=43 // pred_check
          %p690 = pneg %p170
        $region54: #{tpu_custom_call.1} parent=43 // pred_check_branch
          %692 = sbr.rel (%p690) target = $region56
        $region55: #{tpu_custom_call.1} parent=43 // pred_region
          _
        $region56: #{tpu_custom_call.1} parent=43 // pred_fallthru
          _
      $region44: #{tpu_custom_call.1} parent=5 // pred_fallthru
        _
      %p693 = scmp.le.s32.totalorder 2, %s16
      // Predicated region
      $region57: #{tpu_custom_call.1} parent=5 // pred_check
        %p694 = pneg %p693
      $region58: #{tpu_custom_call.1} parent=5 // pred_check_branch
        %696 = sbr.rel (%p694) target = $region60
      $region59: #{tpu_custom_call.1} parent=5 // pred_region
        %s697 = ssub.s32 %s16, 2
        // Predicated region
        $region61: #{tpu_custom_call.1} parent=59 // pred_check
          %p698 = pneg %p176
        $region62: #{tpu_custom_call.1} parent=59 // pred_check_branch
          %700 = sbr.rel (%p698) target = $region64
        $region63: #{tpu_custom_call.1} parent=59 // pred_region
          %p701 = scmp.lt.s32.totalorder %s22, 3
          %s702 = scalar_select %p701, %s22, 3
          %s703 = smul.addr %s702, 8
          %s704 = scalar_lea.vmem %s6, %s703
        $region64: #{tpu_custom_call.1} parent=59 // pred_fallthru
          _
      $region60: #{tpu_custom_call.1} parent=5 // pred_fallthru
        _
    $region6: #{tpu_custom_call.1} parent=1 // loop_footer
      %s20 = sadd.s32 1, %s16
    $region7: #{tpu_custom_call.1} parent=1 // loop_footer_branch
      %15 = sbr.rel target = $region3
    $region8: #{tpu_custom_call.1} parent=1 // loop_exit
      _
    %705 = vsyncpa [#allocation3], 1
    %s706 = scalar_lea.sflag [#allocation3], 1
    %707 = vsyncpa %s706, 1
    %708 = vsyncpa [#allocation5], 1

</llo_original>
